<compile_context>
chip_gen: v6e
topology: v6e:2x2x1
jax: 0.10.0
libtpu: 0.0.40
codegen_flags: <defaults>
</compile_context>

<pallas_src>
import functools

import jax
import jax.numpy as jnp
from jax import lax
from jax.experimental import pallas as pl
from jax.experimental.pallas import tpu as pltpu

_BN_EPS = 1e-5
_INV_SQRT2 = 0.7071067811865476


def _round_up(n, m):
    return ((n + m - 1) // m) * m


# ---------------------------------------------------------------------------
# Pass 1: per-feature sum and sum-of-squares of h = x @ w1, accumulated over
# batch tiles (reduction grid axis -> "arbitrary").  No Linear1 bias: with
# train-mode BN it is mathematically cancelled, and it also makes zero-padded
# batch rows contribute exactly nothing to the sums.
# ---------------------------------------------------------------------------
def _stats_kernel(x_ref, w1_ref, sum_ref, sq_ref):
    @pl.when(pl.program_id(0) == 0)
    def _():
        sum_ref[...] = jnp.zeros_like(sum_ref)
        sq_ref[...] = jnp.zeros_like(sq_ref)

    h = jnp.dot(x_ref[...], w1_ref[...], preferred_element_type=jnp.float32)
    sum_ref[...] += jnp.sum(h, axis=0, keepdims=True)
    sq_ref[...] += jnp.sum(h * h, axis=0, keepdims=True)


# ---------------------------------------------------------------------------
# Pass 2: fused  Linear1 -> (folded BN scale/shift) -> exact GELU -> Linear2,
# tiled over the batch ("parallel" grid axis, lane-dense 128-wide output).
# ---------------------------------------------------------------------------
def _fwd_kernel(x_ref, w1_ref, scale_ref, shift_ref, w2_ref, b2_ref, o_ref):
    # Linear1 (no bias - cancelled by batch-stat BN), f32 accumulation.
    h = jnp.dot(x_ref[...], w1_ref[...], preferred_element_type=jnp.float32)

    # Folded BatchNorm: a single per-feature scale/shift (f32 elementwise).
    h = h * scale_ref[...] + shift_ref[...]

    # Exact (erf) GELU, matching PyTorch's default.
    g = 0.5 * h * (1.0 + lax.erf(h * _INV_SQRT2))

    # Linear2 into the padded, lane-dense output tile.
    out = jnp.dot(g.astype(w2_ref.dtype), w2_ref[...],
                  preferred_element_type=jnp.float32) + b2_ref[...]
    o_ref[...] = out.astype(o_ref.dtype)


def latent_ode_forward(t, x, params, *, tile_b=None, use_bf16_matmul=False):
    """params = dict(w1 (D,H), b1 (H,), gamma (H,), beta (H,), w2 (H,P), b2 (P,)).

    b1 is accepted for interface parity but intentionally unused: with
    train-mode BatchNorm directly after Linear1, a per-feature constant bias
    is exactly removed by the mean subtraction.
    """
    del t  # unused, matches PyTorch forward(t, x)
    B, D = x.shape
    H = params["w1"].shape[1]
    P = params["w2"].shape[1]

    f32 = jnp.float32
    mm_dtype = jnp.bfloat16 if use_bf16_matmul else f32

    # Lane-dense padding of the hidden / output feature dims.
    Hp = _round_up(H, 128)
    Pp = _round_up(P, 128)

    # Batch tiling: multiple of 8 sublanes, up to 256 rows to fill the MXU.
    if tile_b is None:
        tile_b = min(256, _round_up(B, 8))
    tile_b = max(8, _round_up(tile_b, 8))
    Bp = _round_up(B, tile_b)
    nb = Bp // tile_b

    # Zero padding is semantics-preserving:
    #  - padded batch rows give h = 0 (no Linear1 bias) -> contribute nothing
    #    to the batch sums; their output rows are sliced off below.
    #  - padded hidden cols get gamma=beta=0 -> normalized value 0, GELU(0)=0,
    #    and the matching zero rows of w2 contribute nothing.
    #  - padded projection cols are sliced off below.
    xp = jnp.zeros((Bp, D), mm_dtype).at[:B].set(x.astype(mm_dtype))
    w1p = jnp.zeros((D, Hp), mm_dtype).at[:, :H].set(params["w1"].astype(mm_dtype))
    w2p = jnp.zeros((Hp, Pp), mm_dtype).at[:H, :P].set(params["w2"].astype(mm_dtype))
    gammap = jnp.zeros((1, Hp), f32).at[:, :H].set(params["gamma"].astype(f32).reshape(1, H))
    betap = jnp.zeros((1, Hp), f32).at[:, :H].set(params["beta"].astype(f32).reshape(1, H))
    b2p = jnp.zeros((1, Pp), f32).at[:, :P].set(params["b2"].astype(f32).reshape(1, P))

    # ---- Pass 1: batch statistics (tiled accumulation kernel) ----
    h_sum, h_sq = pl.pallas_call(
        _stats_kernel,
        out_shape=(jax.ShapeDtypeStruct((1, Hp), f32),
                   jax.ShapeDtypeStruct((1, Hp), f32)),
        grid=(nb,),
        in_specs=[pl.BlockSpec((tile_b, D), lambda i: (i, 0)),
                  pl.BlockSpec((D, Hp), lambda i: (0, 0))],
        out_specs=[pl.BlockSpec((1, Hp), lambda i: (0, 0)),
                   pl.BlockSpec((1, Hp), lambda i: (0, 0))],
        compiler_params=pltpu.CompilerParams(
            dimension_semantics=("arbitrary",)),
    )(xp, w1p)

    # Fold BN (biased variance, train-mode batch stats) into scale/shift.
    # NOTE: E[h^2]-E[h]^2 form; activations here are O(1) post-Linear so the
    # cancellation error is negligible relative to the 1e-5 eps.
    mean = h_sum / B
    var = jnp.maximum(h_sq / B - mean * mean, 0.0)
    scale = gammap * lax.rsqrt(var + _BN_EPS)
    shift = betap - mean * scale

    # ---- Pass 2: fused forward, batch-parallel grid ----
    out_p = pl.pallas_call(
        _fwd_kernel,
        out_shape=jax.ShapeDtypeStruct((Bp, Pp), f32),
        grid=(nb,),
        in_specs=[pl.BlockSpec((tile_b, D), lambda i: (i, 0)),
                  pl.BlockSpec((D, Hp), lambda i: (0, 0)),
                  pl.BlockSpec((1, Hp), lambda i: (0, 0)),
                  pl.BlockSpec((1, Hp), lambda i: (0, 0)),
                  pl.BlockSpec((Hp, Pp), lambda i: (0, 0)),
                  pl.BlockSpec((1, Pp), lambda i: (0, 0))],
        out_specs=pl.BlockSpec((tile_b, Pp), lambda i: (i, 0)),
        compiler_params=pltpu.CompilerParams(
            dimension_semantics=("parallel",)),
    )(xp, w1p, scale, shift, w2p, b2p)

    return out_p[:B, :P].astype(x.dtype)


def _init_params(key, dim, hidden, proj, dtype=jnp.float32):
    """Deterministic synthetic init (PyTorch-style uniform ranges)."""
    k1, k2, k3, k4 = jax.random.split(key, 4)
    lim1 = 1.0 / jnp.sqrt(dim)
    lim2 = 1.0 / jnp.sqrt(hidden)
    return {
        "w1": jax.random.uniform(k1, (dim, hidden), dtype, -lim1, lim1),
        "b1": jax.random.uniform(k2, (hidden,), dtype, -lim1, lim1),
        "gamma": jnp.ones((hidden,), dtype),
        "beta": jnp.zeros((hidden,), dtype),
        "w2": jax.random.uniform(k3, (hidden, proj), dtype, -lim2, lim2),
        "b2": jax.random.uniform(k4, (proj,), dtype, -lim2, lim2),
    }


def _reference(t, x, p):
    """Pure-JAX replica of the PyTorch forward (includes b1 + centered var,
    demonstrating that dropping b1 inside the kernel is numerically neutral)."""
    del t
    h = x @ p["w1"] + p["b1"]
    mean = h.mean(0, keepdims=True)
    var = ((h - mean) ** 2).mean(0, keepdims=True)
    hn = (h - mean) / jnp.sqrt(var + _BN_EPS) * p["gamma"] + p["beta"]
    g = 0.5 * hn * (1.0 + lax.erf(hn * _INV_SQRT2))
    return g @ p["w2"] + p["b2"]


if __name__ == "__main__":
    # Small shapes consistent with LatentODEfunc(dim, projection_size, hidden_size).
    B, D, H, P = 8, 32, 128, 64
    key = jax.random.PRNGKey(0)
    kx, kp = jax.random.split(key)
    x = jax.random.normal(kx, (B, D), jnp.float32)
    t = jnp.float32(0.0)
    params = _init_params(kp, D, H, P)

    ref = _reference(t, x, params)

    # f32 MXU operands (bit-faithful to the PyTorch forward).
    fwd = jax.jit(functools.partial(latent_ode_forward, params=params))
    out = jax.block_until_ready(fwd(t, x))
    assert out.shape == (B, P)
    assert jnp.allclose(out, ref, atol=2e-4, rtol=2e-4), "mismatch vs reference (f32)"

    # bf16 MXU operands (v6e/v7x throughput path), f32 accumulate + f32 BN/GELU.
    fwd_bf16 = jax.jit(functools.partial(latent_ode_forward, params=params,
                                         use_bf16_matmul=True))
    out_bf16 = jax.block_until_ready(fwd_bf16(t, x))
    assert out_bf16.shape == (B, P)
    assert jnp.allclose(out_bf16, ref, atol=1e-1, rtol=1e-1), "mismatch vs reference (bf16)"

    print("KERNEL_OK")
</pallas_src>

<mosaic_0001>
module attributes {stable_mosaic.version = 11 : i64} {
  func.func @_stats_kernel(%arg0: i32, %arg1: memref<8x32xf32, #tpu.memory_space<vmem>>, %arg2: memref<32x128xf32, #tpu.memory_space<vmem>>, %arg3: memref<1x128xf32, #tpu.memory_space<vmem>>, %arg4: memref<1x128xf32, #tpu.memory_space<vmem>>) attributes {dimension_semantics = [#tpu.dimension_semantics<arbitrary>], iteration_bounds = array<i64: 1>, scalar_prefetch = 0 : i64, scratch_operands = 0 : i64, tpu.core_type = #tpu.core_type<tc>, window_params = [{transform_indices = @transform_0, window_bounds = array<i64: 8, 32>}, {pipeline_mode = #tpu.pipeline_mode<synchronous>, transform_indices = @transform_1, window_bounds = array<i64: 32, 128>}, {pipeline_mode = #tpu.pipeline_mode<synchronous>, transform_indices = @transform_2, window_bounds = array<i64: 1, 128>}, {pipeline_mode = #tpu.pipeline_mode<synchronous>, transform_indices = @transform_3, window_bounds = array<i64: 1, 128>}]} {
    %c0_i32 = arith.constant 0 : i32
    %0 = arith.cmpi eq, %arg0, %c0_i32 : i32
    %1 = arith.extui %0 : i1 to i32
    %c0_i32_0 = arith.constant 0 : i32
    %2 = arith.cmpi ne, %1, %c0_i32_0 : i32
    scf.if %2 {
      %cst_14 = arith.constant 0.000000e+00 : f32
      %17 = vector.broadcast %cst_14 : f32 to vector<1x128xf32>
      %c0_15 = arith.constant 0 : index
      %c0_16 = arith.constant 0 : index
      %18 = vector.load %arg3[%c0_15, %c0_16] : memref<1x128xf32, #tpu.memory_space<vmem>>, vector<1x128xf32>
      tpu.vector_store %arg3[%c0_15, %c0_16], %17 {strides = array<i32>} : memref<1x128xf32, #tpu.memory_space<vmem>>, vector<1x128xf32>,
      %cst_17 = arith.constant 0.000000e+00 : f32
      %19 = vector.broadcast %cst_17 : f32 to vector<1x128xf32>
      %c0_18 = arith.constant 0 : index
      %c0_19 = arith.constant 0 : index
      %20 = vector.load %arg4[%c0_18, %c0_19] : memref<1x128xf32, #tpu.memory_space<vmem>>, vector<1x128xf32>
      tpu.vector_store %arg4[%c0_18, %c0_19], %19 {strides = array<i32>} : memref<1x128xf32, #tpu.memory_space<vmem>>, vector<1x128xf32>,
    } else {
    }
    %c0 = arith.constant 0 : index
    %c0_1 = arith.constant 0 : index
    %3 = vector.load %arg1[%c0, %c0_1] : memref<8x32xf32, #tpu.memory_space<vmem>>, vector<8x32xf32>
    %c0_2 = arith.constant 0 : index
    %c0_3 = arith.constant 0 : index
    %4 = vector.load %arg2[%c0_2, %c0_3] : memref<32x128xf32, #tpu.memory_space<vmem>>, vector<32x128xf32>
    %cst = arith.constant dense<0.000000e+00> : vector<8x128xf32>
    %5 = tpu.matmul %3, %4, %cst {dimension_numbers = #tpu.dot_dimension_numbers<[1], [0], [0], [1], [0, 0, 1, 1], [], []>} : vector<8x32xf32>, vector<32x128xf32>, vector<8x128xf32> -> vector<8x128xf32>
    %c0_4 = arith.constant 0 : index
    %c0_5 = arith.constant 0 : index
    %6 = vector.load %arg3[%c0_4, %c0_5] : memref<1x128xf32, #tpu.memory_space<vmem>>, vector<1x128xf32>
    %cst_6 = arith.constant dense<0.000000e+00> : vector<128xf32>
    %7 = vector.multi_reduction <add>, %5, %cst_6 [0] : vector<8x128xf32> to vector<128xf32>
    %8 = vector.shape_cast %7 : vector<128xf32> to vector<1x128xf32>
    %9 = arith.addf %6, %8 : vector<1x128xf32>
    %c0_7 = arith.constant 0 : index
    %c0_8 = arith.constant 0 : index
    %10 = vector.load %arg3[%c0_7, %c0_8] : memref<1x128xf32, #tpu.memory_space<vmem>>, vector<1x128xf32>
    tpu.vector_store %arg3[%c0_7, %c0_8], %9 {strides = array<i32>} : memref<1x128xf32, #tpu.memory_space<vmem>>, vector<1x128xf32>,
    %c0_9 = arith.constant 0 : index
    %c0_10 = arith.constant 0 : index
    %11 = vector.load %arg4[%c0_9, %c0_10] : memref<1x128xf32, #tpu.memory_space<vmem>>, vector<1x128xf32>
    %12 = arith.mulf %5, %5 : vector<8x128xf32>
    %cst_11 = arith.constant dense<0.000000e+00> : vector<128xf32>
    %13 = vector.multi_reduction <add>, %12, %cst_11 [0] : vector<8x128xf32> to vector<128xf32>
    %14 = vector.shape_cast %13 : vector<128xf32> to vector<1x128xf32>
    %15 = arith.addf %11, %14 : vector<1x128xf32>
    %c0_12 = arith.constant 0 : index
    %c0_13 = arith.constant 0 : index
    %16 = vector.load %arg4[%c0_12, %c0_13] : memref<1x128xf32, #tpu.memory_space<vmem>>, vector<1x128xf32>
    tpu.vector_store %arg4[%c0_12, %c0_13], %15 {strides = array<i32>} : memref<1x128xf32, #tpu.memory_space<vmem>>, vector<1x128xf32>,
    return
  }
  func.func @transform_0(%arg0: i32) -> (i32, i32) {
    %c0_i32 = arith.constant 0 : i32
    %c0_i32_0 = arith.constant 0 : i32
    return %arg0, %c0_i32 : i32, i32
  }
  func.func @transform_1(%arg0: i32) -> (i32, i32) {
    %c0_i32 = arith.constant 0 : i32
    %c0_i32_0 = arith.constant 0 : i32
    %c0_i32_1 = arith.constant 0 : i32
    return %c0_i32, %c0_i32_0 : i32, i32
  }
  func.func @transform_2(%arg0: i32) -> (i32, i32) {
    %c0_i32 = arith.constant 0 : i32
    %c0_i32_0 = arith.constant 0 : i32
    %c0_i32_1 = arith.constant 0 : i32
    return %c0_i32, %c0_i32_0 : i32, i32
  }
  func.func @transform_3(%arg0: i32) -> (i32, i32) {
    %c0_i32 = arith.constant 0 : i32
    %c0_i32_0 = arith.constant 0 : i32
    %c0_i32_1 = arith.constant 0 : i32
    return %c0_i32, %c0_i32_0 : i32, i32
  }
}

module attributes {stable_mosaic.version = 11 : i64} {
  func.func @_fwd_kernel(%arg0: i32, %arg1: memref<8x32xf32, #tpu.memory_space<vmem>>, %arg2: memref<32x128xf32, #tpu.memory_space<vmem>>, %arg3: memref<1x128xf32, #tpu.memory_space<vmem>>, %arg4: memref<1x128xf32, #tpu.memory_space<vmem>>, %arg5: memref<128x128xf32, #tpu.memory_space<vmem>>, %arg6: memref<1x128xf32, #tpu.memory_space<vmem>>, %arg7: memref<8x128xf32, #tpu.memory_space<vmem>>) attributes {dimension_semantics = [#tpu.dimension_semantics<parallel>], iteration_bounds = array<i64: 1>, scalar_prefetch = 0 : i64, scratch_operands = 0 : i64, tpu.core_type = #tpu.core_type<tc>, window_params = [{transform_indices = @transform_0, window_bounds = array<i64: 8, 32>}, {pipeline_mode = #tpu.pipeline_mode<synchronous>, transform_indices = @transform_1, window_bounds = array<i64: 32, 128>}, {pipeline_mode = #tpu.pipeline_mode<synchronous>, transform_indices = @transform_2, window_bounds = array<i64: 1, 128>}, {pipeline_mode = #tpu.pipeline_mode<synchronous>, transform_indices = @transform_3, window_bounds = array<i64: 1, 128>}, {pipeline_mode = #tpu.pipeline_mode<synchronous>, transform_indices = @transform_4, window_bounds = array<i64: 128, 128>}, {pipeline_mode = #tpu.pipeline_mode<synchronous>, transform_indices = @transform_5, window_bounds = array<i64: 1, 128>}, {transform_indices = @transform_6, window_bounds = array<i64: 8, 128>}]} {
    %c0 = arith.constant 0 : index
    %c0_0 = arith.constant 0 : index
    %0 = vector.load %arg1[%c0, %c0_0] : memref<8x32xf32, #tpu.memory_space<vmem>>, vector<8x32xf32>
    %c0_1 = arith.constant 0 : index
    %c0_2 = arith.constant 0 : index
    %1 = vector.load %arg2[%c0_1, %c0_2] : memref<32x128xf32, #tpu.memory_space<vmem>>, vector<32x128xf32>
    %cst = arith.constant dense<0.000000e+00> : vector<8x128xf32>
    %2 = tpu.matmul %0, %1, %cst {dimension_numbers = #tpu.dot_dimension_numbers<[1], [0], [0], [1], [0, 0, 1, 1], [], []>} : vector<8x32xf32>, vector<32x128xf32>, vector<8x128xf32> -> vector<8x128xf32>
    %c0_3 = arith.constant 0 : index
    %c0_4 = arith.constant 0 : index
    %3 = vector.load %arg3[%c0_3, %c0_4] : memref<1x128xf32, #tpu.memory_space<vmem>>, vector<1x128xf32>
    %4 = vector.broadcast %3 : vector<1x128xf32> to vector<8x128xf32>
    %5 = arith.mulf %2, %4 : vector<8x128xf32>
    %c0_5 = arith.constant 0 : index
    %c0_6 = arith.constant 0 : index
    %6 = vector.load %arg4[%c0_5, %c0_6] : memref<1x128xf32, #tpu.memory_space<vmem>>, vector<1x128xf32>
    %7 = vector.broadcast %6 : vector<1x128xf32> to vector<8x128xf32>
    %8 = arith.addf %5, %7 : vector<8x128xf32>
    %cst_7 = arith.constant 5.000000e-01 : f32
    %9 = vector.broadcast %cst_7 : f32 to vector<8x128xf32>
    %10 = arith.mulf %9, %8 : vector<8x128xf32>
    %cst_8 = arith.constant 0.707106769 : f32
    %11 = vector.broadcast %cst_8 : f32 to vector<8x128xf32>
    %12 = arith.mulf %8, %11 : vector<8x128xf32>
    %13 = math.erf %12 : vector<8x128xf32>
    %cst_9 = arith.constant 1.000000e+00 : f32
    %14 = vector.broadcast %cst_9 : f32 to vector<8x128xf32>
    %15 = arith.addf %14, %13 : vector<8x128xf32>
    %16 = arith.mulf %10, %15 : vector<8x128xf32>
    %c0_10 = arith.constant 0 : index
    %c0_11 = arith.constant 0 : index
    %17 = vector.load %arg5[%c0_10, %c0_11] : memref<128x128xf32, #tpu.memory_space<vmem>>, vector<128x128xf32>
    %cst_12 = arith.constant dense<0.000000e+00> : vector<8x128xf32>
    %18 = tpu.matmul %16, %17, %cst_12 {dimension_numbers = #tpu.dot_dimension_numbers<[1], [0], [0], [1], [0, 0, 1, 1], [], []>} : vector<8x128xf32>, vector<128x128xf32>, vector<8x128xf32> -> vector<8x128xf32>
    %c0_13 = arith.constant 0 : index
    %c0_14 = arith.constant 0 : index
    %19 = vector.load %arg6[%c0_13, %c0_14] : memref<1x128xf32, #tpu.memory_space<vmem>>, vector<1x128xf32>
    %20 = vector.broadcast %19 : vector<1x128xf32> to vector<8x128xf32>
    %21 = arith.addf %18, %20 : vector<8x128xf32>
    %c0_15 = arith.constant 0 : index
    %c0_16 = arith.constant 0 : index
    %22 = vector.load %arg7[%c0_15, %c0_16] : memref<8x128xf32, #tpu.memory_space<vmem>>, vector<8x128xf32>
    tpu.vector_store %arg7[%c0_15, %c0_16], %21 {strides = array<i32>} : memref<8x128xf32, #tpu.memory_space<vmem>>, vector<8x128xf32>,
    return
  }
  func.func @transform_0(%arg0: i32) -> (i32, i32) {
    %c0_i32 = arith.constant 0 : i32
    %c0_i32_0 = arith.constant 0 : i32
    return %arg0, %c0_i32 : i32, i32
  }
  func.func @transform_1(%arg0: i32) -> (i32, i32) {
    %c0_i32 = arith.constant 0 : i32
    %c0_i32_0 = arith.constant 0 : i32
    %c0_i32_1 = arith.constant 0 : i32
    return %c0_i32, %c0_i32_0 : i32, i32
  }
  func.func @transform_2(%arg0: i32) -> (i32, i32) {
    %c0_i32 = arith.constant 0 : i32
    %c0_i32_0 = arith.constant 0 : i32
    %c0_i32_1 = arith.constant 0 : i32
    return %c0_i32, %c0_i32_0 : i32, i32
  }
  func.func @transform_3(%arg0: i32) -> (i32, i32) {
    %c0_i32 = arith.constant 0 : i32
    %c0_i32_0 = arith.constant 0 : i32
    %c0_i32_1 = arith.constant 0 : i32
    return %c0_i32, %c0_i32_0 : i32, i32
  }
  func.func @transform_4(%arg0: i32) -> (i32, i32) {
    %c0_i32 = arith.constant 0 : i32
    %c0_i32_0 = arith.constant 0 : i32
    %c0_i32_1 = arith.constant 0 : i32
    return %c0_i32, %c0_i32_0 : i32, i32
  }
  func.func @transform_5(%arg0: i32) -> (i32, i32) {
    %c0_i32 = arith.constant 0 : i32
    %c0_i32_0 = arith.constant 0 : i32
    %c0_i32_1 = arith.constant 0 : i32
    return %c0_i32, %c0_i32_0 : i32, i32
  }
  func.func @transform_6(%arg0: i32) -> (i32, i32) {
    %c0_i32 = arith.constant 0 : i32
    %c0_i32_0 = arith.constant 0 : i32
    return %arg0, %c0_i32 : i32, i32
  }
}

</mosaic_0001>

<llo_original>
// kernel: latent_ode_forward.2
$region0: #{latent_ode_forward.2}
  #allocation0 [shape = 'u32[]', space=smem, size = 0x4, offset = 0x4, fixed_abs, tag = 'smem constant byte address 0x4 - core index']
  #allocation1 [shape = 'u32[144,128]{1,0:T(1,128)}', space=vmem, size = 0x12000, scoped, tag = 'internal scratch']
  %s0 = inlined_call_operand.hbm [shape: f32[8,32], index: 0, kind: input, shape index: {}]
  %s1 = inlined_call_operand.hbm [shape: f32[32,128], index: 1, kind: input, shape index: {}]
  %s2 = inlined_call_operand.vmem [shape: f32[1,128], index: 2, kind: output, shape index: {0}]
  %s3 = inlined_call_operand.vmem [shape: f32[1,128], index: 3, kind: output, shape index: {1}]
  %4 = xla_tuple %s2, %s3
  %s5 = sld [smem:[#allocation0]]
  $region38: #{latent_ode_forward.2} parent=0
    _
  %s7 = ssub.s32 1, %s5
  %s8 = scalar_select 0, %s7, %s5
  $region1: #{latent_ode_forward.2} parent=0
    #allocation2 [shape = 'u8[4096]{0}', space=vmem, size = 0x1000, scoped, tag = 'input window, operand 0, single buffered']
    #allocation3 [shape = 's32[1]{0}', space=sflag, size = 0x4, scoped, tag = 'scoped memory for latent_ode_forward.2']
    #allocation4 [shape = 'u8[16384]{0}', space=vmem, size = 0x4000, scoped, tag = 'input window, operand 1, single buffered']
    #allocation5 [shape = 's32[1]{0}', space=sflag, size = 0x4, scoped, tag = 'scoped memory for latent_ode_forward.2']
    %9 = vsyncpa [#allocation3], 0
    %10 = vsyncpa [#allocation5], 0
    // Predicated region
    $region2: #{latent_ode_forward.2} parent=1 // pred_check
      _
    $region3: #{latent_ode_forward.2} parent=1 // pred_check_branch
      %12 = sbr.rel (0) target = $region5
    $region4: #{latent_ode_forward.2} parent=1 // pred_region
      %s14 = ssub.s32 128, 128
      %15 = vsyncadd [#allocation3], %s14
      %s17 = sshll.u32 [#allocation2], 4
      %s18 = int_to_ptr.vmem [resolvable:$true] %s17
      %20 = dma.hbm_to_vmem [thread:$0]  %s0, 128, %s18, [#allocation3]
    $region5: #{latent_ode_forward.2} parent=1 // pred_fallthru
      _
    // Predicated region
    $region6: #{latent_ode_forward.2} parent=1 // pred_check
      _
    $region7: #{latent_ode_forward.2} parent=1 // pred_check_branch
      %22 = sbr.rel (0) target = $region9
    $region8: #{latent_ode_forward.2} parent=1 // pred_region
      %s24 = ssub.s32 512, 512
      %25 = vsyncadd [#allocation5], %s24
      %s26 = sshll.u32 [#allocation4], 4
      %s27 = int_to_ptr.vmem [resolvable:$true] %s26
      %32 = dma.hbm_to_vmem [thread:$0]  %s1, 512, %s27, [#allocation5], 128, 128, 8
    $region9: #{latent_ode_forward.2} parent=1 // pred_fallthru
      _
    // Predicated region
    $region10: #{latent_ode_forward.2} parent=1 // pred_check
      _
    $region11: #{latent_ode_forward.2} parent=1 // pred_check_branch
      %34 = sbr.rel (0) target = $region13
    $region12: #{latent_ode_forward.2} parent=1 // pred_region
      %35 = dma.done [#allocation3], 128
    $region13: #{latent_ode_forward.2} parent=1 // pred_fallthru
      _
    // Predicated region
    $region14: #{latent_ode_forward.2} parent=1 // pred_check
      _
    $region15: #{latent_ode_forward.2} parent=1 // pred_check_branch
      %37 = sbr.rel (0) target = $region17
    $region16: #{latent_ode_forward.2} parent=1 // pred_region
      %38 = dma.done [#allocation5], 512
    $region17: #{latent_ode_forward.2} parent=1 // pred_fallthru
      _
    %p39 = scmp.eq.s32.totalorder 0, 0
    // Predicated region
    $region18: #{latent_ode_forward.2} parent=1 // pred_check
      %p40 = pneg %p39
    $region19: #{latent_ode_forward.2} parent=1 // pred_check_branch
      %42 = sbr.rel (%p40) target = $region21
    $region20: #{latent_ode_forward.2} parent=1 // pred_region
      %43 = vst [vmem:[%s2] sm:$0x1] 0.0
      %44 = vst [vmem:[%s3] sm:$0x1] 0.0
    $region21: #{latent_ode_forward.2} parent=1 // pred_fallthru
      _
    %v45 = vld [vmem:[#allocation2] sm:$0xff]
    %v46 = vld [vmem:[#allocation4] sm:$0xff]
    %v47 = vld [vmem:[#allocation4 + $0x8] sm:$0xff]
    %v48 = vld [vmem:[#allocation4 + $0x10] sm:$0xff]
    %v49 = vld [vmem:[#allocation4 + $0x18] sm:$0xff]
    %vm50 = vcmask 261120
    %v52 = vsel %vm50, %v45, 0
    %54 = vmatprep.subr.mxu0 0.0
    %55 = vmatpush1.msra.mxu0 0.0
    %56 = vmatprep.subr.mxu0 0.0
    %57 = vmatpush1.msra.mxu0 0.0
    %58 = vmatprep.subr.mxu0 0.0
    %59 = vmatpush1.msra.mxu0 0.0
    %60 = vmatprep.subr.mxu0 0.0
    %61 = vmatpush1.msra.mxu0 0.0
    %62 = vmatprep.subr.mxu0 0.0
    %63 = vmatpush1.msra.mxu0 0.0
    %64 = vmatprep.subr.mxu0 0.0
    %65 = vmatpush1.msra.mxu0 0.0
    %66 = vmatprep.subr.mxu0 0.0
    %67 = vmatpush1.msra.mxu0 0.0
    %68 = vmatprep.subr.mxu0 0.0
    %69 = vmatpush1.msra.mxu0 0.0
    %70 = vmatprep.subr.mxu0 0.0
    %71 = vmatpush1.msra.mxu0 0.0
    %72 = vmatprep.subr.mxu0 0.0
    %73 = vmatpush1.msra.mxu0 0.0
    %74 = vmatprep.subr.mxu0 0.0
    %75 = vmatpush1.msra.mxu0 0.0
    %76 = vmatprep.subr.mxu0 0.0
    %77 = vmatpush1.msra.mxu0 0.0
    %78 = vmatprep.subr.mxu0 0.0
    %79 = vmatpush1.msra.mxu0 %v49
    %80 = vmatprep.subr.mxu0 0.0
    %81 = vmatpush1.msra.mxu0 %v48
    %82 = vmatprep.subr.mxu0 0.0
    %83 = vmatpush1.msra.mxu0 %v47
    %84 = vmatprep.subr.mxu0 0.0
    %85 = vmatpush1.msra.mxu0 %v46
    %86 = vmatprep.subr.mxu0 0.0
    %87 = vmatpush2.msra.mxu0 0.0
    %88 = vmatprep.subr.mxu0 0.0
    %89 = vmatpush2.msra.mxu0 0.0
    %90 = vmatprep.subr.mxu0 0.0
    %91 = vmatpush2.msra.mxu0 0.0
    %92 = vmatprep.subr.mxu0 0.0
    %93 = vmatpush2.msra.mxu0 0.0
    %94 = vmatprep.subr.mxu0 0.0
    %95 = vmatpush2.msra.mxu0 0.0
    %96 = vmatprep.subr.mxu0 0.0
    %97 = vmatpush2.msra.mxu0 0.0
    %98 = vmatprep.subr.mxu0 0.0
    %99 = vmatpush2.msra.mxu0 0.0
    %100 = vmatprep.subr.mxu0 0.0
    %101 = vmatpush2.msra.mxu0 0.0
    %102 = vmatprep.subr.mxu0 0.0
    %103 = vmatpush2.msra.mxu0 0.0
    %104 = vmatprep.subr.mxu0 0.0
    %105 = vmatpush2.msra.mxu0 0.0
    %106 = vmatprep.subr.mxu0 0.0
    %107 = vmatpush2.msra.mxu0 0.0
    %108 = vmatprep.subr.mxu0 0.0
    %109 = vmatpush2.msra.mxu0 0.0
    %110 = vmatprep.subr.mxu0 0.0
    %111 = vmatpush2.msra.mxu0 0.0
    %112 = vmatprep.subr.mxu0 0.0
    %113 = vmatpush2.msra.mxu0 0.0
    %114 = vmatprep.subr.mxu0 0.0
    %115 = vmatpush2.msra.mxu0 0.0
    %116 = vmatprep.subr.mxu0 0.0
    %117 = vmatpush2.msra.mxu0 0.0
    %118 = vmatprep.mubr.f32.mxu0 0.0
    %119 = vmatmul.mubr.f32.gmra.mxu0 %v52
    %v120 = vpop.f32.mrf.mxu0
    %v121 = vadd.f32 0.0, %v120
    %v122 = vpop.f32.mrf.mxu0
    %123 = vdwg.mxu0
    %v124 = vld [vmem:[%s2] sm:$0x1]
    %v125 = vrot.slane %v121, 4
    %v126 = vadd.f32 %v121, %v125
    %v127 = vrot.slane %v126, 2
    %v128 = vadd.f32 %v126, %v127
    %v129 = vrot.slane %v128, 1
    %v130 = vadd.f32 %v128, %v129
    %v131 = vadd.f32 %v124, %v130
    %132 = vst [vmem:[%s2] sm:$0x1] %v131
    %v133 = vld [vmem:[%s3] sm:$0x1]
    %v134 = vmul.f32 %v121, %v121
    %v135 = vrot.slane %v134, 4
    %v136 = vadd.f32 %v134, %v135
    %v137 = vrot.slane %v136, 2
    %v138 = vadd.f32 %v136, %v137
    %v139 = vrot.slane %v138, 1
    %v140 = vadd.f32 %v138, %v139
    %v141 = vadd.f32 %v133, %v140
    %142 = vst [vmem:[%s3] sm:$0x1] %v141
    // Predicated region
    $region22: #{latent_ode_forward.2} parent=1 // pred_check
      _
    $region23: #{latent_ode_forward.2} parent=1 // pred_check_branch
      %144 = sbr.rel (0) target = $region25
    $region24: #{latent_ode_forward.2} parent=1 // pred_region
      _
    $region25: #{latent_ode_forward.2} parent=1 // pred_fallthru
      _
    // Predicated region
    $region26: #{latent_ode_forward.2} parent=1 // pred_check
      _
    $region27: #{latent_ode_forward.2} parent=1 // pred_check_branch
      %146 = sbr.rel (0) target = $region29
    $region28: #{latent_ode_forward.2} parent=1 // pred_region
      _
    $region29: #{latent_ode_forward.2} parent=1 // pred_fallthru
      _
    // Predicated region
    $region30: #{latent_ode_forward.2} parent=1 // pred_check
      _
    $region31: #{latent_ode_forward.2} parent=1 // pred_check_branch
      %148 = sbr.rel (0) target = $region33
    $region32: #{latent_ode_forward.2} parent=1 // pred_region
      _
    $region33: #{latent_ode_forward.2} parent=1 // pred_fallthru
      _
    // Predicated region
    $region34: #{latent_ode_forward.2} parent=1 // pred_check
      _
    $region35: #{latent_ode_forward.2} parent=1 // pred_check_branch
      %150 = sbr.rel (0) target = $region37
    $region36: #{latent_ode_forward.2} parent=1 // pred_region
      _
    $region37: #{latent_ode_forward.2} parent=1 // pred_fallthru
      _
    %151 = vsyncpa [#allocation3], 1
    %152 = vsyncpa [#allocation5], 1

// kernel: latent_ode_forward.3
$region0: #{latent_ode_forward.3}
  #allocation0 [shape = 'u32[]', space=smem, size = 0x4, offset = 0x4, fixed_abs, tag = 'smem constant byte address 0x4 - core index']
  #allocation1 [shape = 'u32[144,128]{1,0:T(1,128)}', space=vmem, size = 0x12000, scoped, tag = 'internal scratch']
  %s0 = inlined_call_operand.vmem [shape: f32[8,32], index: 0, kind: input, shape index: {}]
  %s1 = inlined_call_operand.vmem [shape: f32[32,128], index: 1, kind: input, shape index: {}]
  %s2 = inlined_call_operand.vmem [shape: f32[1,128], index: 2, kind: input, shape index: {}]
  %s3 = inlined_call_operand.vmem [shape: f32[1,128], index: 3, kind: input, shape index: {}]
  %s4 = inlined_call_operand.vmem [shape: f32[128,128], index: 4, kind: input, shape index: {}]
  %s5 = inlined_call_operand.vmem [shape: f32[1,128], index: 5, kind: input, shape index: {}]
  %s6 = inlined_call_operand.hbm [shape: f32[8,128], index: 6, kind: output, shape index: {}]
  %s7 = sld [smem:[#allocation0]]
  $region34: #{latent_ode_forward.3} parent=0
    _
  %s9 = ssub.s32 1, %s7
  %s10 = scalar_select 0, %s9, %s7
  $region1: #{latent_ode_forward.3} parent=0
    #allocation2 [shape = 'u8[4096]{0}', space=vmem, size = 0x1000, scoped, tag = 'output window, operand 0, single buffered']
    #allocation3 [shape = 's32[1]{0}', space=sflag, size = 0x4, scoped, tag = 'scoped memory for latent_ode_forward.3']
    %11 = vsyncpa [#allocation3], 0
    // Predicated region
    $region2: #{latent_ode_forward.3} parent=1 // pred_check
      _
    $region3: #{latent_ode_forward.3} parent=1 // pred_check_branch
      %13 = sbr.rel (0) target = $region5
    $region4: #{latent_ode_forward.3} parent=1 // pred_region
      _
    $region5: #{latent_ode_forward.3} parent=1 // pred_fallthru
      _
    // Predicated region
    $region6: #{latent_ode_forward.3} parent=1 // pred_check
      _
    $region7: #{latent_ode_forward.3} parent=1 // pred_check_branch
      %15 = sbr.rel (0) target = $region9
    $region8: #{latent_ode_forward.3} parent=1 // pred_region
      _
    $region9: #{latent_ode_forward.3} parent=1 // pred_fallthru
      _
    // Predicated region
    $region10: #{latent_ode_forward.3} parent=1 // pred_check
      _
    $region11: #{latent_ode_forward.3} parent=1 // pred_check_branch
      %17 = sbr.rel (0) target = $region13
    $region12: #{latent_ode_forward.3} parent=1 // pred_region
      _
    $region13: #{latent_ode_forward.3} parent=1 // pred_fallthru
      _
    // Predicated region
    $region14: #{latent_ode_forward.3} parent=1 // pred_check
      _
    $region15: #{latent_ode_forward.3} parent=1 // pred_check_branch
      %19 = sbr.rel (0) target = $region17
    $region16: #{latent_ode_forward.3} parent=1 // pred_region
      _
    $region17: #{latent_ode_forward.3} parent=1 // pred_fallthru
      _
    // Predicated region
    $region18: #{latent_ode_forward.3} parent=1 // pred_check
      _
    $region19: #{latent_ode_forward.3} parent=1 // pred_check_branch
      %21 = sbr.rel (0) target = $region21
    $region20: #{latent_ode_forward.3} parent=1 // pred_region
      _
    $region21: #{latent_ode_forward.3} parent=1 // pred_fallthru
      _
    // Predicated region
    $region22: #{latent_ode_forward.3} parent=1 // pred_check
      _
    $region23: #{latent_ode_forward.3} parent=1 // pred_check_branch
      %23 = sbr.rel (0) target = $region25
    $region24: #{latent_ode_forward.3} parent=1 // pred_region
      _
    $region25: #{latent_ode_forward.3} parent=1 // pred_fallthru
      _
    %v24 = vld [vmem:[%s0] sm:$0xff]
    %v25 = vld [vmem:[%s1] sm:$0xff]
    %v26 = vld [vmem:[%s1 + $0x8] sm:$0xff]
    %v27 = vld [vmem:[%s1 + $0x10] sm:$0xff]
    %v28 = vld [vmem:[%s1 + $0x18] sm:$0xff]
    %vm29 = vcmask 261120
    %v31 = vsel %vm29, %v24, 0
    %33 = vmatprep.subr.mxu0 0.0
    %34 = vmatpush1.msra.mxu0 0.0
    %35 = vmatprep.subr.mxu0 0.0
    %36 = vmatpush1.msra.mxu0 0.0
    %37 = vmatprep.subr.mxu0 0.0
    %38 = vmatpush1.msra.mxu0 0.0
    %39 = vmatprep.subr.mxu0 0.0
    %40 = vmatpush1.msra.mxu0 0.0
    %41 = vmatprep.subr.mxu0 0.0
    %42 = vmatpush1.msra.mxu0 0.0
    %43 = vmatprep.subr.mxu0 0.0
    %44 = vmatpush1.msra.mxu0 0.0
    %45 = vmatprep.subr.mxu0 0.0
    %46 = vmatpush1.msra.mxu0 0.0
    %47 = vmatprep.subr.mxu0 0.0
    %48 = vmatpush1.msra.mxu0 0.0
    %49 = vmatprep.subr.mxu0 0.0
    %50 = vmatpush1.msra.mxu0 0.0
    %51 = vmatprep.subr.mxu0 0.0
    %52 = vmatpush1.msra.mxu0 0.0
    %53 = vmatprep.subr.mxu0 0.0
    %54 = vmatpush1.msra.mxu0 0.0
    %55 = vmatprep.subr.mxu0 0.0
    %56 = vmatpush1.msra.mxu0 0.0
    %57 = vmatprep.subr.mxu0 0.0
    %58 = vmatpush1.msra.mxu0 %v28
    %59 = vmatprep.subr.mxu0 0.0
    %60 = vmatpush1.msra.mxu0 %v27
    %61 = vmatprep.subr.mxu0 0.0
    %62 = vmatpush1.msra.mxu0 %v26
    %63 = vmatprep.subr.mxu0 0.0
    %64 = vmatpush1.msra.mxu0 %v25
    %65 = vmatprep.subr.mxu0 0.0
    %66 = vmatpush2.msra.mxu0 0.0
    %67 = vmatprep.subr.mxu0 0.0
    %68 = vmatpush2.msra.mxu0 0.0
    %69 = vmatprep.subr.mxu0 0.0
    %70 = vmatpush2.msra.mxu0 0.0
    %71 = vmatprep.subr.mxu0 0.0
    %72 = vmatpush2.msra.mxu0 0.0
    %73 = vmatprep.subr.mxu0 0.0
    %74 = vmatpush2.msra.mxu0 0.0
    %75 = vmatprep.subr.mxu0 0.0
    %76 = vmatpush2.msra.mxu0 0.0
    %77 = vmatprep.subr.mxu0 0.0
    %78 = vmatpush2.msra.mxu0 0.0
    %79 = vmatprep.subr.mxu0 0.0
    %80 = vmatpush2.msra.mxu0 0.0
    %81 = vmatprep.subr.mxu0 0.0
    %82 = vmatpush2.msra.mxu0 0.0
    %83 = vmatprep.subr.mxu0 0.0
    %84 = vmatpush2.msra.mxu0 0.0
    %85 = vmatprep.subr.mxu0 0.0
    %86 = vmatpush2.msra.mxu0 0.0
    %87 = vmatprep.subr.mxu0 0.0
    %88 = vmatpush2.msra.mxu0 0.0
    %89 = vmatprep.subr.mxu0 0.0
    %90 = vmatpush2.msra.mxu0 0.0
    %91 = vmatprep.subr.mxu0 0.0
    %92 = vmatpush2.msra.mxu0 0.0
    %93 = vmatprep.subr.mxu0 0.0
    %94 = vmatpush2.msra.mxu0 0.0
    %95 = vmatprep.subr.mxu0 0.0
    %96 = vmatpush2.msra.mxu0 0.0
    %97 = vmatprep.mubr.f32.mxu0 0.0
    %98 = vmatmul.mubr.f32.gmra.mxu0 %v31
    %v99 = vpop.f32.mrf.mxu0
    %v100 = vadd.f32 0.0, %v99
    %v101 = vpop.f32.mrf.mxu0
    %102 = vdwg.mxu0
    %v103 = vld [vmem:[%s2] sm:$0x1]
    %v105 = vlaneseq
    %v106 = vshrl.u32 %v105, 7
    %v107 = vsub.s32 0, %v106
    %v108 = vrot.slane %v103, %v107
    %v110 = vmul.f32 %v100, %v108
    %v111 = vld [vmem:[%s3] sm:$0x1]
    %v113 = vlaneseq
    %v114 = vshrl.u32 %v113, 7
    %v115 = vsub.s32 0, %v114
    %v116 = vrot.slane %v111, %v115
    %v118 = vadd.f32 %v110, %v116
    %v119 = vmul.f32 %v118, 0.5
    %v120 = vmul.f32 %v118, 0.70710677
    %v121 = verf.f32.pop %v120
    %v122 = vadd.f32 %v121, 1.0
    %v123 = vmul.f32 %v119, %v122
    %v124 = vld [vmem:[%s4] sm:$0xff]
    %v125 = vld [vmem:[%s4 + $0x8] sm:$0xff]
    %v126 = vld [vmem:[%s4 + $0x10] sm:$0xff]
    %v127 = vld [vmem:[%s4 + $0x18] sm:$0xff]
    %v128 = vld [vmem:[%s4 + $0x20] sm:$0xff]
    %v129 = vld [vmem:[%s4 + $0x28] sm:$0xff]
    %v130 = vld [vmem:[%s4 + $0x30] sm:$0xff]
    %v131 = vld [vmem:[%s4 + $0x38] sm:$0xff]
    %v132 = vld [vmem:[%s4 + $0x40] sm:$0xff]
    %v133 = vld [vmem:[%s4 + $0x48] sm:$0xff]
    %v134 = vld [vmem:[%s4 + $0x50] sm:$0xff]
    %v135 = vld [vmem:[%s4 + $0x58] sm:$0xff]
    %v136 = vld [vmem:[%s4 + $0x60] sm:$0xff]
    %v137 = vld [vmem:[%s4 + $0x68] sm:$0xff]
    %v138 = vld [vmem:[%s4 + $0x70] sm:$0xff]
    %v139 = vld [vmem:[%s4 + $0x78] sm:$0xff]
    %v140 = vld [vmem:[%s5] sm:$0x1]
    %v142 = vlaneseq
    %v143 = vshrl.u32 %v142, 7
    %v144 = vsub.s32 0, %v143
    %v145 = vrot.slane %v140, %v144
    %147 = vmatprep.subr.mxu0 0.0
    %148 = vmatpush1.msra.mxu0 %v139
    %149 = vmatprep.subr.mxu0 0.0
    %150 = vmatpush1.msra.mxu0 %v138
    %151 = vmatprep.subr.mxu0 0.0
    %152 = vmatpush1.msra.mxu0 %v137
    %153 = vmatprep.subr.mxu0 0.0
    %154 = vmatpush1.msra.mxu0 %v136
    %155 = vmatprep.subr.mxu0 0.0
    %156 = vmatpush1.msra.mxu0 %v135
    %157 = vmatprep.subr.mxu0 0.0
    %158 = vmatpush1.msra.mxu0 %v134
    %159 = vmatprep.subr.mxu0 0.0
    %160 = vmatpush1.msra.mxu0 %v133
    %161 = vmatprep.subr.mxu0 0.0
    %162 = vmatpush1.msra.mxu0 %v132
    %163 = vmatprep.subr.mxu0 0.0
    %164 = vmatpush1.msra.mxu0 %v131
    %165 = vmatprep.subr.mxu0 0.0
    %166 = vmatpush1.msra.mxu0 %v130
    %167 = vmatprep.subr.mxu0 0.0
    %168 = vmatpush1.msra.mxu0 %v129
    %169 = vmatprep.subr.mxu0 0.0
    %170 = vmatpush1.msra.mxu0 %v128
    %171 = vmatprep.subr.mxu0 0.0
    %172 = vmatpush1.msra.mxu0 %v127
    %173 = vmatprep.subr.mxu0 0.0
    %174 = vmatpush1.msra.mxu0 %v126
    %175 = vmatprep.subr.mxu0 0.0
    %176 = vmatpush1.msra.mxu0 %v125
    %177 = vmatprep.subr.mxu0 0.0
    %178 = vmatpush1.msra.mxu0 %v124
    %179 = vmatprep.subr.mxu0 0.0
    %180 = vmatpush2.msra.mxu0 0.0
    %181 = vmatprep.subr.mxu0 0.0
    %182 = vmatpush2.msra.mxu0 0.0
    %183 = vmatprep.subr.mxu0 0.0
    %184 = vmatpush2.msra.mxu0 0.0
    %185 = vmatprep.subr.mxu0 0.0
    %186 = vmatpush2.msra.mxu0 0.0
    %187 = vmatprep.subr.mxu0 0.0
    %188 = vmatpush2.msra.mxu0 0.0
    %189 = vmatprep.subr.mxu0 0.0
    %190 = vmatpush2.msra.mxu0 0.0
    %191 = vmatprep.subr.mxu0 0.0
    %192 = vmatpush2.msra.mxu0 0.0
    %193 = vmatprep.subr.mxu0 0.0
    %194 = vmatpush2.msra.mxu0 0.0
    %195 = vmatprep.subr.mxu0 0.0
    %196 = vmatpush2.msra.mxu0 0.0
    %197 = vmatprep.subr.mxu0 0.0
    %198 = vmatpush2.msra.mxu0 0.0
    %199 = vmatprep.subr.mxu0 0.0
    %200 = vmatpush2.msra.mxu0 0.0
    %201 = vmatprep.subr.mxu0 0.0
    %202 = vmatpush2.msra.mxu0 0.0
    %203 = vmatprep.subr.mxu0 0.0
    %204 = vmatpush2.msra.mxu0 0.0
    %205 = vmatprep.subr.mxu0 0.0
    %206 = vmatpush2.msra.mxu0 0.0
    %207 = vmatprep.subr.mxu0 0.0
    %208 = vmatpush2.msra.mxu0 0.0
    %209 = vmatprep.subr.mxu0 0.0
    %210 = vmatpush2.msra.mxu0 0.0
    %211 = vmatprep.mubr.f32.mxu0 0.0
    %212 = vmatmul.mubr.f32.gmra.mxu0 %v123
    %v213 = vpop.f32.mrf.mxu0
    %v214 = vadd.f32 %v145, %v213
    %v215 = vpop.f32.mrf.mxu0
    %216 = vdwg.mxu0
    %217 = vst [vmem:[#allocation2] sm:$0xff] %v214
    // Predicated region
    $region26: #{latent_ode_forward.3} parent=1 // pred_check
      _
    $region27: #{latent_ode_forward.3} parent=1 // pred_check_branch
      %219 = sbr.rel (0) target = $region29
    $region28: #{latent_ode_forward.3} parent=1 // pred_region
      %s221 = ssub.s32 128, 128
      %222 = vsyncadd [#allocation3], %s221
      %s224 = sshll.u32 [#allocation2], 4
      %s225 = int_to_ptr.vmem [resolvable:$true] %s224
      %227 = dma.vmem_to_hbm [thread:$0]  %s225, 128, %s6, [#allocation3]
    $region29: #{latent_ode_forward.3} parent=1 // pred_fallthru
      _
    // Predicated region
    $region30: #{latent_ode_forward.3} parent=1 // pred_check
      _
    $region31: #{latent_ode_forward.3} parent=1 // pred_check_branch
      %229 = sbr.rel (0) target = $region33
    $region32: #{latent_ode_forward.3} parent=1 // pred_region
      %230 = dma.done [#allocation3], 128
    $region33: #{latent_ode_forward.3} parent=1 // pred_fallthru
      _
    %231 = vsyncpa [#allocation3], 1

</llo_original>
